<compile_context>
chip_gen: v7x
topology: tpu7x:2x2x1
jax: 0.10.0
libtpu: 0.0.40
codegen_flags: <defaults>
</compile_context>

<pallas_src>
import jax
import jax.numpy as jnp
from jax.experimental import pallas as pl
from jax.experimental.pallas import tpu as pltpu


def _norm2d_kernel(x_ref, w_ref, o_ref):
    """Shared body for both layouts.

    channel-on-sublane : x (bn, C, T)         w (1, C, 1)
    pixel-on-sublane   : x (bn, C, S, 128)    w (1, C, 1, 1)
    The L2 reduction is always over axis=1 (the channel axis).
    """
    x = x_ref[...].astype(jnp.float32)
    # rsqrt goes to the EUP slot; the VPU only does multiplies.
    # NOTE: no eps, matching torch.div(x, norm) exactly (all-zero channel
    # vectors produce inf/NaN in both implementations).
    inv_norm = jax.lax.rsqrt(jnp.sum(x * x, axis=1, keepdims=True))
    w = w_ref[...].astype(jnp.float32)
    o_ref[...] = (x * inv_norm * w).astype(o_ref.dtype)


def _tpu_params():
    """(target_block_bytes, vmem_limit_bytes, num_tensorcores) per generation."""
    kind = ""
    try:
        kind = jax.devices()[0].device_kind.lower()
    except Exception:
        pass
    if "v6" in kind:
        # v6e: ~1.4 TB/s HBM, 128 MiB VMEM. >=1 MiB blocks already plateau the
        # roofline; 4 MiB shaves per-step overhead with ample VMEM headroom.
        blk, vmem, ntc = 4 << 20, 64 << 20, 1
    elif "v5" in kind:
        # v5e: 0.82 TB/s HBM and only a 16 MiB *default* scoped VMEM limit.
        # Keep 2 MiB blocks but keep the explicit override so full
        # double-buffering survives.
        blk, vmem, ntc = 2 << 20, 32 << 20, 1
    elif "7" in kind:
        # v7x: 3.2 TB/s HBM wants bigger blocks to hide the ~0.35 us/step
        # overhead, but only 64 MiB VMEM per TC -> cap scoped limit at 48 MiB.
        blk, vmem, ntc = 6 << 20, 48 << 20, 2
    else:
        blk, vmem, ntc = 4 << 20, 48 << 20, 1
    # Defensive: if the hardware query is available, never request more than
    # ~3/4 of physical VMEM.
    try:
        cap = getattr(pltpu.get_tpu_info(), "vmem_capacity_bytes", None)
        if cap:
            vmem = min(vmem, int(cap) * 3 // 4)
    except Exception:
        pass
    # Budget: 2x in + 2x out double buffers + in-kernel f32 temp ~= 6x block.
    blk = min(blk, max(1 << 20, vmem // 6))
    return blk, vmem, ntc


def _pick_bn(n, max_bn, lane_blocks, num_tc):
    """Largest divisor of n not exceeding max_bn, preferring total grid-step
    counts that divide evenly across the TensorCores (megacore balance)."""
    max_bn = max(1, min(int(max_bn), n))
    divisors = [d for d in range(1, max_bn + 1) if n % d == 0]
    balanced = [d for d in divisors if ((n // d) * lane_blocks) % num_tc == 0]
    pool = balanced if balanced else divisors
    return max(pool) if pool else 1


def _fold_batch(n, per_batch_bytes, block_bytes, inner_blocks, num_tc):
    """When the whole (reshaped) image fits one block, fold batch into the
    block so tiny per-step DMAs don't dominate, while keeping ~4 grid steps
    per TensorCore for pipelining / megacore sharding when n allows it."""
    if inner_blocks != 1 or n <= 1:
        return 1
    min_steps = 4 * num_tc
    max_bn = min(n,
                 max(1, block_bytes // max(per_batch_bytes, 1)),
                 max(1, n // min_steps))
    return _pick_bn(n, max_bn, inner_blocks, num_tc)


def norm2d(x_nchw, weight, *, block_bytes=None, vmem_limit_bytes=None):
    """x_nchw: (N, C, H, W); weight: (C,). Returns (N, C, H, W)."""
    n, c, h, w = x_nchw.shape
    hw = h * w
    itemsize = jnp.dtype(x_nchw.dtype).itemsize

    auto_blk, auto_vmem, num_tc = _tpu_params()
    if block_bytes is None:
        block_bytes = auto_blk
    if vmem_limit_bytes is None:
        vmem_limit_bytes = auto_vmem

    w_f32 = weight.astype(jnp.float32)

    # Small channel count underfills the (8,128) sublane tile when channels sit
    # on sublanes.  If H*W is 128-divisible with >= 8 lane rows, put pixels on
    # sublanes + lanes instead and reduce over the non-minor channel axis.
    # (In a fused model XLA chooses the producer layout; standalone, the
    # reshape is layout plumbing handled outside the kernel.)
    small_c = (c * itemsize < 32) and (hw % 128 == 0) and (hw // 128 >= 8)

    if small_c:
        s = hw // 128
        full_bytes = c * s * 128 * itemsize
        if full_bytes <= block_bytes or s <= 8:
            s_tile = s                       # full extent: no masking
        else:
            rows = max(8, (block_bytes // (c * 128 * itemsize)) // 8 * 8)
            s_tile = min(rows, s)
        n_inner = pl.cdiv(s, s_tile)         # ragged tail (if any) is masked
        bn = _fold_batch(n, c * s_tile * 128 * itemsize, block_bytes,
                         n_inner, num_tc)
        x_in = x_nchw.reshape(n, c, s, 128)
        w_in = w_f32.reshape(1, c, 1, 1)
        blk = (bn, c, s_tile, 128)
        idx = lambda i, j: (i, 0, j, 0)
        w_blk = (1, c, 1, 1)
        w_idx = lambda i, j: (0, 0, 0, 0)
        out_shape = jax.ShapeDtypeStruct((n, c, s, 128), x_nchw.dtype)
    else:
        full_bytes = c * hw * itemsize
        if full_bytes <= block_bytes or hw <= 128:
            hw_tile = hw                     # full extent: exempt from 128 rule
        else:
            lanes = max(128, (block_bytes // (c * itemsize)) // 128 * 128)
            hw_tile = min(lanes, hw)
        n_inner = pl.cdiv(hw, hw_tile)       # ragged tail block (if any) masked
        bn = _fold_batch(n, c * hw_tile * itemsize, block_bytes,
                         n_inner, num_tc)
        x_in = x_nchw.reshape(n, c, hw)
        w_in = w_f32.reshape(1, c, 1)
        blk = (bn, c, hw_tile)
        idx = lambda i, j: (i, 0, j)
        w_blk = (1, c, 1)
        w_idx = lambda i, j: (0, 0, 0)
        out_shape = jax.ShapeDtypeStruct((n, c, hw), x_nchw.dtype)

    grid = (n // bn, int(n_inner))

    out = pl.pallas_call(
        _norm2d_kernel,
        out_shape=out_shape,
        grid_spec=pltpu.PrefetchScalarGridSpec(
            num_scalar_prefetch=0,
            grid=grid,
            in_specs=[
                pl.BlockSpec(blk, idx),
                pl.BlockSpec(w_blk, w_idx),  # DMA'd once, kept resident
            ],
            out_specs=pl.BlockSpec(blk, idx),
        ),
        compiler_params=pltpu.CompilerParams(
            dimension_semantics=("parallel", "parallel"),
            vmem_limit_bytes=int(vmem_limit_bytes),
        ),
    )(x_in, w_in)

    return out.reshape(n, c, h, w)


def norm2d_ref(x_nchw, weight):
    """Pure-JAX reference mirroring the PyTorch forward (sqrt + divide)."""
    xf = x_nchw.astype(jnp.float32)
    norm = jnp.sqrt(jnp.sum(xf * xf, axis=1, keepdims=True))
    out = weight.astype(jnp.float32).reshape(1, -1, 1, 1) * (xf / norm)
    return out.astype(x_nchw.dtype)


if __name__ == "__main__":
    C = 4
    # Deterministic init matching nn.Parameter(torch.ones(channels) * 20.0)
    weight = jnp.full((C,), 20.0, dtype=jnp.float32)

    def check(x, **kw):
        out = jax.block_until_ready(norm2d(x, weight, **kw))
        ref = norm2d_ref(x, weight)
        assert out.shape == x.shape
        assert jnp.allclose(out, ref, atol=1e-4, rtol=1e-5), "mismatch vs reference"
        return out

    # 1) Primary small shape consistent with the module.
    x1 = jax.random.normal(jax.random.PRNGKey(0), (2, C, 16, 16), jnp.float32)
    check(x1)

    # 2) H*W not a multiple of 128: full-extent lane block, no pad / no slice.
    x2 = jax.random.normal(jax.random.PRNGKey(1), (2, C, 10, 10), jnp.float32)
    check(x2)

    # 3) Small-C pixel-on-sublane layout path (hw % 128 == 0, hw/128 >= 8).
    x3 = jax.random.normal(jax.random.PRNGKey(2), (2, C, 32, 32), jnp.float32)
    check(x3)

    # 4) Multi-tile lane axis with a masked ragged tail block
    #    (force a tiny block budget: hw=576 -> tiles of 256, tail of 64).
    x4 = jax.random.normal(jax.random.PRNGKey(3), (2, C, 24, 24), jnp.float32)
    check(x4, block_bytes=4096)

    # 5) Batch-folding path (whole image in one lane block, bn > 1).
    x5 = jax.random.normal(jax.random.PRNGKey(4), (16, C, 16, 16), jnp.float32)
    check(x5)

    print("KERNEL_OK")
</pallas_src>

<mosaic_0001>
module attributes {stable_mosaic.version = 11 : i64} {
  func.func @_norm2d_kernel(%arg0: i32, %arg1: i32, %arg2: memref<1x4x256xf32, #tpu.memory_space<vmem>>, %arg3: memref<1x4x1xf32, #tpu.memory_space<vmem>>, %arg4: memref<1x4x256xf32, #tpu.memory_space<vmem>>) attributes {dimension_semantics = [#tpu.dimension_semantics<parallel>, #tpu.dimension_semantics<parallel>], iteration_bounds = array<i64: 2, 1>, scalar_prefetch = 0 : i64, scratch_operands = 0 : i64, tpu.core_type = #tpu.core_type<tc>, window_params = [{transform_indices = @transform_0, window_bounds = array<i64: 1, 4, 256>}, {pipeline_mode = #tpu.pipeline_mode<synchronous>, transform_indices = @transform_1, window_bounds = array<i64: 1, 4, 1>}, {transform_indices = @transform_2, window_bounds = array<i64: 1, 4, 256>}]} {
    %c0 = arith.constant 0 : index
    %c0_0 = arith.constant 0 : index
    %c0_1 = arith.constant 0 : index
    %0 = vector.load %arg2[%c0, %c0_0, %c0_1] : memref<1x4x256xf32, #tpu.memory_space<vmem>>, vector<1x4x256xf32>
    %1 = arith.mulf %0, %0 : vector<1x4x256xf32>
    %cst = arith.constant dense<0.000000e+00> : vector<1x256xf32>
    %2 = vector.multi_reduction <add>, %1, %cst [1] : vector<1x4x256xf32> to vector<1x256xf32>
    %3 = vector.shape_cast %2 : vector<1x256xf32> to vector<1x1x256xf32>
    %4 = math.rsqrt %3 : vector<1x1x256xf32>
    %c0_2 = arith.constant 0 : index
    %c0_3 = arith.constant 0 : index
    %c0_4 = arith.constant 0 : index
    %5 = vector.load %arg3[%c0_2, %c0_3, %c0_4] : memref<1x4x1xf32, #tpu.memory_space<vmem>>, vector<1x4x1xf32>
    %6 = vector.broadcast %4 : vector<1x1x256xf32> to vector<1x4x256xf32>
    %7 = arith.mulf %0, %6 : vector<1x4x256xf32>
    %8 = vector.broadcast %5 : vector<1x4x1xf32> to vector<1x4x256xf32>
    %9 = arith.mulf %7, %8 : vector<1x4x256xf32>
    %c0_5 = arith.constant 0 : index
    %c0_6 = arith.constant 0 : index
    %c0_7 = arith.constant 0 : index
    %10 = vector.load %arg4[%c0_5, %c0_6, %c0_7] : memref<1x4x256xf32, #tpu.memory_space<vmem>>, vector<1x4x256xf32>
    tpu.vector_store %arg4[%c0_5, %c0_6, %c0_7], %9 {strides = array<i32>} : memref<1x4x256xf32, #tpu.memory_space<vmem>>, vector<1x4x256xf32>,
    return
  }
  func.func @transform_0(%arg0: i32, %arg1: i32) -> (i32, i32, i32) {
    %c0_i32 = arith.constant 0 : i32
    %c0_i32_0 = arith.constant 0 : i32
    return %arg0, %c0_i32, %arg1 : i32, i32, i32
  }
  func.func @transform_1(%arg0: i32, %arg1: i32) -> (i32, i32, i32) {
    %c0_i32 = arith.constant 0 : i32
    %c0_i32_0 = arith.constant 0 : i32
    %c0_i32_1 = arith.constant 0 : i32
    %c0_i32_2 = arith.constant 0 : i32
    return %c0_i32, %c0_i32_0, %c0_i32_1 : i32, i32, i32
  }
  func.func @transform_2(%arg0: i32, %arg1: i32) -> (i32, i32, i32) {
    %c0_i32 = arith.constant 0 : i32
    %c0_i32_0 = arith.constant 0 : i32
    return %arg0, %c0_i32, %arg1 : i32, i32, i32
  }
}

</mosaic_0001>

<llo_original>
// kernel: tpu_custom_call.1
$region0: #{tpu_custom_call.1}
  #allocation0 [shape = 'u32[]', space=smem, size = 0x4, offset = 0x4, fixed_abs, tag = 'smem constant byte address 0x4 - core index']
  #allocation1 [shape = 'u32[144,128]{1,0:T(1,128)}', space=vmem, size = 0x12000, scoped, tag = 'internal scratch']
  %s0 = inlined_call_operand.hbm [shape: f32[2,4,256], index: 0, kind: input, shape index: {}]
  %s1 = inlined_call_operand.vmem [shape: f32[1,4,1], index: 1, kind: input, shape index: {}]
  %s2 = inlined_call_operand.hbm [shape: f32[2,4,256], index: 2, kind: output, shape index: {}]
  %s3 = sld [smem:[#allocation0]]
  $region45: #{tpu_custom_call.1} parent=0
    _
  %s5 = ssub.s32 1, %s3
  %s6 = scalar_select 0, %s5, %s3
  $region1: #{tpu_custom_call.1} parent=0
    #allocation2 [shape = 'u8[8192]{0}', space=vmem, size = 0x2000, scoped, tag = 'input window, operand 0']
    #allocation3 [shape = 's32[2]{0}', space=sflag, size = 0x8, scoped, tag = 'scoped memory for tpu_custom_call.1']
    #allocation4 [shape = 's32[2]{0}', space=sflag, size = 0x8, scoped, tag = 'scoped memory for tpu_custom_call.1']
    #allocation5 [shape = 'u8[8192]{0}', space=vmem, size = 0x2000, scoped, tag = 'output window, operand 0']
    %7 = vsyncpa [#allocation3], 0
    %s8 = scalar_lea.sflag [#allocation3], 1
    %9 = vsyncpa %s8, 0
    %10 = vsyncpa [#allocation4], 0
    %s11 = scalar_lea.sflag [#allocation4], 1
    %12 = vsyncpa %s11, 0
    loop: start=0, step=1, limit=4
    $region2: #{tpu_custom_call.1} parent=1 // loop_pre_header
      _
    $region3: #{tpu_custom_call.1} parent=1 // loop_header
      %s14 = sphi 0, %s18
      %p15 = scmp.ge.s32.totalorder %s14, 4
      %s21 = sphi 0, %s33
      %s22 = sphi 0, %s29
      %s23 = sphi 0, %s21
      %s24 = sphi 0, %s22
      %s25 = sphi 0, %s23
      %s26 = sphi 0, %s24
      %s38 = sphi 0, %s40
      %s41 = sphi 0, %s38
      %s42 = sphi 0, %s41
      %s58 = sphi 0, %s42
      %s62 = sphi 0, %s62
      %s64 = sphi 0, %s62
      %s65 = sphi 0, %s64
      %s79 = sphi 0, %s65
      %s87 = sphi 0, %s89
      %s90 = sphi 0, %s87
      %s91 = sphi 0, %s90
      %s107 = sphi 0, %s91
    $region4: #{tpu_custom_call.1} parent=1 // loop_header_branch
      %17 = sbr.rel (%p15) target = $region8
    $region5: #{tpu_custom_call.1} parent=1 // loop_body
      %s19 = ssub.s32 %s14, 1
      %s20 = ssub.s32 %s14, 2
      %s27 = sadd.s32 1, %s22
      %p28 = scmp.ge.s32.totalorder %s27, 1
      %s29 = scalar_select %p28, 0, %s27
      %s30 = sadd.s32 1, %s21
      %s31 = scalar_select %p28, %s30, %s21
      %p32 = scmp.ge.s32.totalorder %s31, 2
      %s33 = scalar_select %p32, 0, %s31
      %s34 = ssub.s32 %s21, %s33
      %s35 = ssub.s32 %s22, %s29
      %s36 = sor.u32 %s34, %s35
      %p37 = scmp.eq.s32.totalorder %s36, 0
      %s39 = sadd.s32 %s38, 1
      %s40 = scalar_select %p37, %s38, %s39
      %p43 = pneg %p37
      %p44 = scmp.eq.s32.totalorder %s14, 1
      %p45 = por %p43, %p44
      %p46 = scmp.ne.s32.totalorder %s38, %s41
      %p47 = scmp.eq.s32.totalorder %s14, 0
      %p48 = por %p46, %p47
      %p49 = scmp.ne.s32.totalorder %s38, %s41
      %p50 = scmp.eq.s32.totalorder %s19, 1
      %p51 = por %p49, %p50
      %p52 = scmp.ne.s32.totalorder %s41, %s42
      %p53 = scmp.eq.s32.totalorder %s19, 0
      %p54 = por %p52, %p53
      %p55 = scmp.ne.s32.totalorder %s41, %s42
      %p56 = scmp.eq.s32.totalorder %s20, 1
      %p57 = por %p55, %p56
      %p59 = scmp.ne.s32.totalorder %s42, %s58
      %p60 = scmp.eq.s32.totalorder %s20, 0
      %p61 = por %p59, %p60
      %s63 = sadd.s32 %s62, 1
      %p66 = scmp.eq.s32.totalorder %s14, 1
      %p67 = scmp.ne.s32.totalorder %s62, %s64
      %p68 = scmp.eq.s32.totalorder %s14, 0
      %p69 = por %p67, %p68
      %p70 = scmp.ne.s32.totalorder %s62, %s64
      %p71 = scmp.eq.s32.totalorder %s19, 1
      %p72 = por %p70, %p71
      %p73 = scmp.ne.s32.totalorder %s64, %s65
      %p74 = scmp.eq.s32.totalorder %s19, 0
      %p75 = por %p73, %p74
      %p76 = scmp.ne.s32.totalorder %s64, %s65
      %p77 = scmp.eq.s32.totalorder %s20, 1
      %p78 = por %p76, %p77
      %p80 = scmp.ne.s32.totalorder %s65, %s79
      %p81 = scmp.eq.s32.totalorder %s20, 0
      %p82 = por %p80, %p81
      %s83 = ssub.s32 %s21, %s33
      %s84 = ssub.s32 %s22, %s29
      %s85 = sor.u32 %s83, %s84
      %p86 = scmp.eq.s32.totalorder %s85, 0
      %s88 = sadd.s32 %s87, 1
      %s89 = scalar_select %p86, %s87, %s88
      %p92 = pneg %p86
      %p93 = scmp.eq.s32.totalorder %s14, 1
      %p94 = por %p92, %p93
      %p95 = scmp.ne.s32.totalorder %s87, %s90
      %p96 = scmp.eq.s32.totalorder %s14, 0
      %p97 = por %p95, %p96
      %p98 = scmp.ne.s32.totalorder %s87, %s90
      %p99 = scmp.eq.s32.totalorder %s19, 1
      %p100 = por %p98, %p99
      %p101 = scmp.ne.s32.totalorder %s90, %s91
      %p102 = scmp.eq.s32.totalorder %s19, 0
      %p103 = por %p101, %p102
      %p104 = scmp.ne.s32.totalorder %s90, %s91
      %p105 = scmp.eq.s32.totalorder %s20, 1
      %p106 = por %p104, %p105
      %p108 = scmp.ne.s32.totalorder %s91, %s107
      %p109 = scmp.eq.s32.totalorder %s20, 0
      %p110 = por %p108, %p109
      %p111 = scmp.le.s32.totalorder 1, %s14
      %p112 = scmp.lt.s32.totalorder %s14, 3
      %p113 = pnand %p111, %p112
      %p114 = pneg %p113
      // Predicated region
      $region9: #{tpu_custom_call.1} parent=5 // pred_check
        _
      $region10: #{tpu_custom_call.1} parent=5 // pred_check_branch
        %116 = sbr.rel (%p113) target = $region12
      $region11: #{tpu_custom_call.1} parent=5 // pred_region
        %s117 = ssub.s32 %s14, 1
        // Predicated region
        $region13: #{tpu_custom_call.1} parent=11 // pred_check
          %p118 = pneg %p75
        $region14: #{tpu_custom_call.1} parent=11 // pred_check_branch
          %120 = sbr.rel (%p118) target = $region16
        $region15: #{tpu_custom_call.1} parent=11 // pred_region
          _
        $region16: #{tpu_custom_call.1} parent=11 // pred_fallthru
          _
      $region12: #{tpu_custom_call.1} parent=5 // pred_fallthru
        _
      %p121 = scmp.lt.s32.totalorder %s14, 2
      // Predicated region
      $region17: #{tpu_custom_call.1} parent=5 // pred_check
        %p122 = pneg %p121
      $region18: #{tpu_custom_call.1} parent=5 // pred_check_branch
        %124 = sbr.rel (%p122) target = $region20
      $region19: #{tpu_custom_call.1} parent=5 // pred_region
        // Predicated region
        $region21: #{tpu_custom_call.1} parent=19 // pred_check
          %p125 = pneg %p48
        $region22: #{tpu_custom_call.1} parent=19 // pred_check_branch
          %127 = sbr.rel (%p125) target = $region24
        $region23: #{tpu_custom_call.1} parent=19 // pred_region
          %s128 = sand.u32 %s38, 1
          %s129 = scalar_lea.sflag [#allocation3], %s128
          %s130 = sand.u32 %s38, 1
          %s131 = smul.addr %s130, 8
          %s132 = scalar_lea.vmem [#allocation2], %s131
          %s133 = smul.u32 2, %s22
          %s135 = ssub.s32 128, 128
          %136 = vsyncadd %s129, %s135
          %s137 = smul.addr %s21, 2
          %s138 = sadd.s32 %s133, %s137
          %s139 = smul.addr %s138, 64
          %s140 = scalar_lea.hbm %s0, %s139
          %s142 = sshll.u32 %s132, 4
          %s143 = int_to_ptr.vmem [resolvable:$true] %s142
          %145 = dma.hbm_to_vmem [thread:$0]  %s140, 128, %s143, %s129
        $region24: #{tpu_custom_call.1} parent=19 // pred_fallthru
          _
      $region20: #{tpu_custom_call.1} parent=5 // pred_fallthru
        _
      %p146 = scmp.le.s32.totalorder 1, %s14
      %p147 = scmp.lt.s32.totalorder %s14, 3
      %p148 = pnand %p146, %p147
      %p149 = pneg %p148
      // Predicated region
      $region25: #{tpu_custom_call.1} parent=5 // pred_check
        _
      $region26: #{tpu_custom_call.1} parent=5 // pred_check_branch
        %151 = sbr.rel (%p148) target = $region28
      $region27: #{tpu_custom_call.1} parent=5 // pred_region
        %s152 = ssub.s32 %s14, 1
        %s153 = sand.u32 %s41, 1
        %s154 = scalar_lea.sflag [#allocation3], %s153
        %s155 = sand.u32 %s41, 1
        %s156 = smul.addr %s155, 8
        %s157 = scalar_lea.vmem [#allocation2], %s156
        // Predicated region
        $region29: #{tpu_custom_call.1} parent=27 // pred_check
          %p158 = pneg %p54
        $region30: #{tpu_custom_call.1} parent=27 // pred_check_branch
          %160 = sbr.rel (%p158) target = $region32
        $region31: #{tpu_custom_call.1} parent=27 // pred_region
          %161 = dma.done %s154, 128
        $region32: #{tpu_custom_call.1} parent=27 // pred_fallthru
          _
        %s162 = sand.u32 %s41, 1
        %s163 = scalar_lea.sflag [#allocation3], %s162
        %s164 = sand.u32 %s41, 1
        %s165 = smul.addr %s164, 8
        %s166 = scalar_lea.vmem [#allocation2], %s165
        %p167 = pneg %p54
        %p168 = pneg %p51
        %p169 = pneg %p75
        %p170 = pneg %p72
        %p171 = pneg %p103
        %p172 = pneg %p100
        %s173 = sand.u32 %s90, 1
        %s174 = scalar_lea.sflag [#allocation4], %s173
        %s175 = sand.u32 %s90, 1
        %s176 = smul.addr %s175, 8
        %s177 = scalar_lea.vmem [#allocation5], %s176
        %s178 = smul.u32 2, %s24
        %s179 = smul.u32 2, %s24
        %v180 = vld [vmem:[%s157] sm:$0xff]
        %v181 = vmul.f32 %v180, %v180
        %v183 = vcombine.high %v181, %v181
        %vm185 = vcmask 1043456
        %v186 = vsel %vm185, %v181, 0.0
        %v187 = vrot.slane %v186, 4
        %v188 = vadd.f32 %v186, %v187
        %v189 = vrot.slane %v188, 2
        %v190 = vadd.f32 %v188, %v189
        %v191 = vrot.slane %v190, 1
        %v192 = vadd.f32 %v190, %v191
        %v193 = vsel %vm185, %v183, 0.0
        %v194 = vrot.slane %v193, 4
        %v195 = vadd.f32 %v193, %v194
        %v196 = vrot.slane %v195, 2
        %v197 = vadd.f32 %v195, %v196
        %v198 = vrot.slane %v197, 1
        %v199 = vadd.f32 %v197, %v198
        %v200 = vrsqrt.pop %v192
        %v201 = vrsqrt.pop %v199
        %v202 = vld [vmem:[%s1] sm:$0xf]
        %v205 = vcombine.low %v200, %v201
        %v207 = vmul.f32 %v180, %v205
        %209 = vset.pattern.permute.xlu0 0
        %210 = vperm.xlu0 %209, %v202
        %v211 = vpop.permute.xlu0 %210
        %v213 = vunpack.c.l.s4 839922192
        %v214 = vunpack.c.0.s8 %v213
        %v215 = vlaneseq
        %v216 = vshrl.u32 %v215, 7
        %v217 = vsub.s32 %v214, %v216
        %v218 = vrot.slane %v211, %v217
        %v220 = vmul.f32 %v207, %v218
        %221 = vst [vmem:[%s177] sm:$0xff] %v220
        %s222 = sand.u32 %s90, 1
        %s223 = scalar_lea.sflag [#allocation4], %s222
        %s224 = sand.u32 %s90, 1
        %s225 = smul.addr %s224, 8
        %s226 = scalar_lea.vmem [#allocation5], %s225
        // Predicated region
        $region33: #{tpu_custom_call.1} parent=27 // pred_check
          %p227 = pneg %p100
        $region34: #{tpu_custom_call.1} parent=27 // pred_check_branch
          %229 = sbr.rel (%p227) target = $region36
        $region35: #{tpu_custom_call.1} parent=27 // pred_region
          %s230 = smul.u32 2, %s24
          %s232 = ssub.s32 128, 128
          %233 = vsyncadd %s223, %s232
          %s234 = smul.addr %s23, 2
          %s235 = sadd.s32 %s230, %s234
          %s236 = smul.addr %s235, 64
          %s237 = scalar_lea.hbm %s2, %s236
          %s239 = sshll.u32 %s226, 4
          %s240 = int_to_ptr.vmem [resolvable:$true] %s239
          %242 = dma.vmem_to_hbm [thread:$0]  %s240, 128, %s237, %s223
        $region36: #{tpu_custom_call.1} parent=27 // pred_fallthru
          _
      $region28: #{tpu_custom_call.1} parent=5 // pred_fallthru
        _
      %p243 = scmp.le.s32.totalorder 2, %s14
      // Predicated region
      $region37: #{tpu_custom_call.1} parent=5 // pred_check
        %p244 = pneg %p243
      $region38: #{tpu_custom_call.1} parent=5 // pred_check_branch
        %246 = sbr.rel (%p244) target = $region40
      $region39: #{tpu_custom_call.1} parent=5 // pred_region
        %s247 = ssub.s32 %s14, 2
        // Predicated region
        $region41: #{tpu_custom_call.1} parent=39 // pred_check
          %p248 = pneg %p106
        $region42: #{tpu_custom_call.1} parent=39 // pred_check_branch
          %250 = sbr.rel (%p248) target = $region44
        $region43: #{tpu_custom_call.1} parent=39 // pred_region
          %s251 = sand.u32 %s91, 1
          %s252 = scalar_lea.sflag [#allocation4], %s251
          %s253 = sand.u32 %s91, 1
          %s254 = smul.addr %s253, 8
          %s255 = scalar_lea.vmem [#allocation5], %s254
          %256 = dma.done %s252, 128
        $region44: #{tpu_custom_call.1} parent=39 // pred_fallthru
          _
      $region40: #{tpu_custom_call.1} parent=5 // pred_fallthru
        _
    $region6: #{tpu_custom_call.1} parent=1 // loop_footer
      %s18 = sadd.s32 1, %s14
    $region7: #{tpu_custom_call.1} parent=1 // loop_footer_branch
      %13 = sbr.rel target = $region3
    $region8: #{tpu_custom_call.1} parent=1 // loop_exit
      _
    %257 = vsyncpa [#allocation3], 1
    %s258 = scalar_lea.sflag [#allocation3], 1
    %259 = vsyncpa %s258, 1
    %260 = vsyncpa [#allocation4], 1
    %s261 = scalar_lea.sflag [#allocation4], 1
    %262 = vsyncpa %s261, 1

</llo_original>
